<compile_context>
chip_gen: v5e
topology: v5e:2x2
jax: 0.10.0
libtpu: 0.0.40
codegen_flags: <defaults>
</compile_context>

<pallas_src>
import functools
import math

import jax
import jax.numpy as jnp
from jax import lax
from jax.experimental import pallas as pl
from jax.experimental.pallas import tpu as pltpu

_EPS = 1e-05


# -----------------------------------------------------------------------------
# Main kernel: lane-dense blocks (1, C, tile_t*F), F a power of two (incl. 1).
# -----------------------------------------------------------------------------
def _channel_norm_kernel_lanedense(x_ref, g_ref, b_ref, o_ref, *, F, inv_cf):
    x = x_ref[...].astype(jnp.float32)                   # (1, C, LT), LT = tile_t*F
    LT = x.shape[-1]

    # Column sums over the channel (sublane) axis.
    cs = jnp.sum(x, axis=1, keepdims=True)               # (1, 1, LT)
    cs2 = jnp.sum(x * x, axis=1, keepdims=True)          # (1, 1, LT)

    # Exact segmented sum + broadcast over aligned F-lane groups (XOR butterfly,
    # log2(F) steps).  The partner for lane i at step s is lane i^s, identified
    # by rolling the lane-index array with the *same* roll op, so correctness
    # does not depend on the roll direction convention.  Pure XLU/VPU work on
    # tiny (1, 1, LT) vectors -> hidden under the HBM-bound block DMA.
    if F > 1:
        lane = lax.broadcasted_iota(jnp.int32, (1, 1, LT), 2)
        s = 1
        while s < F:
            tgt = lane ^ s
            ai = pltpu.roll(lane, s, axis=2)
            pick = ai == tgt
            cs = cs + jnp.where(pick, pltpu.roll(cs, s, axis=2),
                                pltpu.roll(cs, LT - s, axis=2))
            cs2 = cs2 + jnp.where(pick, pltpu.roll(cs2, s, axis=2),
                                  pltpu.roll(cs2, LT - s, axis=2))
            s *= 2

    mean = cs * inv_cf                                    # per-(b, t) mean
    var = jnp.maximum(cs2 * inv_cf - mean * mean, 0.0)    # biased (unbiased=False)
    inv_std = lax.rsqrt(var + _EPS)                       # EUP slot, no sqrt+div
    out = (x - mean) * inv_std * g_ref[...] + b_ref[...]
    o_ref[...] = out.astype(o_ref.dtype)


# -----------------------------------------------------------------------------
# Fallback kernel for non-power-of-two F: natural layout, reduce over (C, F).
# -----------------------------------------------------------------------------
def _channel_norm_kernel_natural(x_ref, g_ref, b_ref, o_ref, *, inv_cf):
    x = x_ref[...].astype(jnp.float32)                    # (1, C, tile_t, F)
    s = jnp.sum(jnp.sum(x, axis=3, keepdims=True), axis=1, keepdims=True)
    s2 = jnp.sum(jnp.sum(x * x, axis=3, keepdims=True), axis=1, keepdims=True)
    mean = s * inv_cf                                     # (1, 1, tile_t, 1)
    var = jnp.maximum(s2 * inv_cf - mean * mean, 0.0)
    inv_std = lax.rsqrt(var + _EPS)
    o_ref[...] = ((x - mean) * inv_std * g_ref[...] + b_ref[...]).astype(o_ref.dtype)


# -----------------------------------------------------------------------------
# Tile selection (VMEM budget + lane legality + >= ~4 grid steps for v7x).
# -----------------------------------------------------------------------------
def _choose_tile_t(B, T, F, per_col_bytes, budget):
    fit = max(1, budget // max(per_col_bytes, 1))
    want_tiles = -(-4 // max(B, 1))                       # ceil(4 / B): feed 2 TCs
    target = max(1, T // max(want_tiles, 1))
    tile = min(T, fit, target)
    if tile >= T:
        return T
    step = 128 // math.gcd(128, F)                        # tile_t*F % 128 == 0
    tile = max(step, (tile // step) * step)
    if tile >= T:
        return T
    for cand in range(tile, step - 1, -step):             # prefer an exact divisor
        if T % cand == 0:
            return cand
    return tile                                           # ragged last block (masked)


def _vmem_limit(per_col_bytes, tile_t):
    # Explicit scoped-VMEM limit: v5e's default is only 16 MiB; keep <= 48 MiB so
    # it also fits v7x's 64 MiB physical VMEM.
    # TODO(synk): extremely large C*F (working set beyond ~48 MiB at the minimal
    # legal tile) would need a CF-tiled two-pass variant; not needed here.
    return int(min(48 << 20, max(32 << 20, per_col_bytes * tile_t + (8 << 20))))


# -----------------------------------------------------------------------------
# Wrappers
# -----------------------------------------------------------------------------
def _channel_norm_natural(x, gamma, beta, *, tile_t=None):
    B, C, T, F = x.shape
    isz = x.dtype.itemsize
    # F < 128 lanes pad to 128 in VMEM; budget with the padded width.
    per_col = C * max(F, 128) * (4 * isz + 24)
    if tile_t is None:
        fit = max(8, ((24 << 20) // max(per_col, 1)) // 8 * 8)
        if T <= fit:
            tile_t = T
        else:
            tile_t = fit
            for cand in range(fit, 7, -8):
                if T % cand == 0:
                    tile_t = cand
                    break
    assert tile_t == T or tile_t % 8 == 0, "illegal T tile"
    nt = pl.cdiv(T, tile_t)
    n = x.size
    cost = pl.CostEstimate(flops=8 * n, transcendentals=B * T,
                           bytes_accessed=2 * x.nbytes + gamma.nbytes + beta.nbytes)
    kernel = functools.partial(_channel_norm_kernel_natural, inv_cf=1.0 / (C * F))
    return pl.pallas_call(
        kernel,
        out_shape=jax.ShapeDtypeStruct((B, C, T, F), x.dtype),
        grid=(B, nt),
        in_specs=[
            pl.BlockSpec((1, C, tile_t, F), lambda b, t: (b, 0, t, 0)),
            pl.BlockSpec((1, C, 1, F), lambda b, t: (0, 0, 0, 0)),   # resident
            pl.BlockSpec((1, C, 1, F), lambda b, t: (0, 0, 0, 0)),   # resident
        ],
        out_specs=pl.BlockSpec((1, C, tile_t, F), lambda b, t: (b, 0, t, 0)),
        compiler_params=pltpu.CompilerParams(
            dimension_semantics=("parallel", "parallel"),
            vmem_limit_bytes=_vmem_limit(per_col, tile_t)),
        cost_estimate=cost,
    )(x, gamma.astype(jnp.float32), beta.astype(jnp.float32))


def channel_norm(x, gamma, beta, *, tile_t=None):
    """Pallas ChannelNorm.  x: (B, C, T, F); gamma/beta: (1, C, 1, F)."""
    B, C, T, F = x.shape
    assert gamma.shape == (1, C, 1, F) and beta.shape == (1, C, 1, F)

    if F & (F - 1):                       # non power-of-two F -> natural-layout path
        return _channel_norm_natural(x, gamma, beta, tile_t=tile_t)

    isz = x.dtype.itemsize
    # Bytes per T column: 2x in bufs + 2x out bufs + resident f32 gamma/beta
    # (conservatively double-counted) + ~1 live f32 temp of the block.
    per_col = C * F * (4 * isz + 24)
    if tile_t is None:
        tile_t = _choose_tile_t(B, T, F, per_col, budget=24 << 20)
    assert tile_t == T or (tile_t * F) % 128 == 0, "illegal T tile for this F"
    LT = tile_t * F
    nt = pl.cdiv(T, tile_t)

    # Free reshape (merges contiguous minor dims; no HBM relayout).
    xf = x.reshape(B, C, T * F)
    # Tiny resident affine params, pre-tiled to exactly one lane-dense block.
    g_t = jnp.broadcast_to(gamma.astype(jnp.float32),
                           (1, C, tile_t, F)).reshape(1, C, LT)
    b_t = jnp.broadcast_to(beta.astype(jnp.float32),
                           (1, C, tile_t, F)).reshape(1, C, LT)

    n = x.size
    cost = pl.CostEstimate(flops=8 * n, transcendentals=B * T,
                           bytes_accessed=2 * x.nbytes + g_t.nbytes + b_t.nbytes)

    kernel = functools.partial(_channel_norm_kernel_lanedense,
                               F=F, inv_cf=1.0 / (C * F))
    out = pl.pallas_call(
        kernel,
        out_shape=jax.ShapeDtypeStruct((B, C, T * F), x.dtype),
        grid=(B, nt),
        in_specs=[
            pl.BlockSpec((1, C, LT), lambda b, t: (b, 0, t)),
            pl.BlockSpec((1, C, LT), lambda b, t: (0, 0, 0)),   # resident gamma
            pl.BlockSpec((1, C, LT), lambda b, t: (0, 0, 0)),   # resident beta
        ],
        out_specs=pl.BlockSpec((1, C, LT), lambda b, t: (b, 0, t)),
        compiler_params=pltpu.CompilerParams(
            dimension_semantics=("parallel", "parallel"),
            vmem_limit_bytes=_vmem_limit(per_col, tile_t)),
        cost_estimate=cost,
    )(xf, g_t, b_t)
    return out.reshape(B, C, T, F)


def channel_norm_ref(x, gamma, beta):
    """Pure-JAX reference mirroring the PyTorch forward exactly."""
    F = x.shape[-1]
    dims = (1,) if F == 1 else (1, 3)
    xf = x.astype(jnp.float32)
    mean = jnp.mean(xf, axis=dims, keepdims=True)
    var = jnp.mean((xf - mean) ** 2, axis=dims, keepdims=True)   # unbiased=False
    std = jnp.sqrt(var + _EPS)
    return ((xf - mean) / std * gamma + beta).astype(x.dtype)


if __name__ == "__main__":
    key = jax.random.PRNGKey(0)
    k1, k2, k3, k4, k5, k6, k7 = jax.random.split(key, 7)

    # --- primary check: input_dim = (C, F) = (4, 16), module-default init ---
    B, C, T, F = 2, 4, 16, 16
    x = jax.random.normal(k1, (B, C, T, F), dtype=jnp.float32)
    gamma = jnp.ones((1, C, 1, F), dtype=jnp.float32)    # nn.init.ones_
    beta = jnp.zeros((1, C, 1, F), dtype=jnp.float32)    # nn.init.zeros_
    out = jax.block_until_ready(channel_norm(x, gamma, beta))
    assert out.shape == (B, C, T, F)
    assert jnp.allclose(out, channel_norm_ref(x, gamma, beta),
                        atol=1e-5, rtol=1e-5), "mismatch (default affine)"

    # --- non-trivial affine parameters ---
    gamma2 = jax.random.normal(k2, (1, C, 1, F), dtype=jnp.float32)
    beta2 = jax.random.normal(k3, (1, C, 1, F), dtype=jnp.float32)
    out2 = jax.block_until_ready(channel_norm(x, gamma2, beta2))
    assert jnp.allclose(out2, channel_norm_ref(x, gamma2, beta2),
                        atol=1e-5, rtol=1e-5), "mismatch (random affine)"

    # --- F == 1 path (module uses dims=(1,)); lane-dense T, no butterfly ---
    x1 = jax.random.normal(k4, (2, 6, 128, 1), dtype=jnp.float32)
    g1 = jnp.ones((1, 6, 1, 1), dtype=jnp.float32)
    b1 = jnp.zeros((1, 6, 1, 1), dtype=jnp.float32)
    out1 = jax.block_until_ready(channel_norm(x1, g1, b1))
    assert jnp.allclose(out1, channel_norm_ref(x1, g1, b1),
                        atol=1e-5, rtol=1e-5), "mismatch (F==1)"

    # --- multi-T-tile path (forced tile -> grid=(1, 4)) ---
    x2 = jax.random.normal(k5, (1, 2, 256, 4), dtype=jnp.float32)
    g2 = jax.random.normal(k6, (1, 2, 1, 4), dtype=jnp.float32)
    b2 = jnp.zeros((1, 2, 1, 4), dtype=jnp.float32)
    out3 = jax.block_until_ready(channel_norm(x2, g2, b2, tile_t=64))
    assert jnp.allclose(out3, channel_norm_ref(x2, g2, b2),
                        atol=1e-5, rtol=1e-5), "mismatch (tiled T)"

    # --- non-power-of-two F -> natural-layout fallback kernel ---
    x3 = jax.random.normal(k7, (1, 5, 16, 3), dtype=jnp.float32)
    g3 = jnp.ones((1, 5, 1, 3), dtype=jnp.float32)
    b3 = jnp.zeros((1, 5, 1, 3), dtype=jnp.float32)
    out4 = jax.block_until_ready(channel_norm(x3, g3, b3))
    assert jnp.allclose(out4, channel_norm_ref(x3, g3, b3),
                        atol=1e-5, rtol=1e-5), "mismatch (non-pow2 F)"

    print("KERNEL_OK")
</pallas_src>

<mosaic_0001>
module attributes {stable_mosaic.version = 11 : i64} {
  func.func @_channel_norm_kernel_lanedense(%arg0: i32, %arg1: i32, %arg2: memref<1x4x128xf32, #tpu.memory_space<vmem>>, %arg3: memref<1x4x128xf32, #tpu.memory_space<vmem>>, %arg4: memref<1x4x128xf32, #tpu.memory_space<vmem>>, %arg5: memref<1x4x128xf32, #tpu.memory_space<vmem>>) attributes {dimension_semantics = [#tpu.dimension_semantics<parallel>, #tpu.dimension_semantics<parallel>], iteration_bounds = array<i64: 2, 2>, scalar_prefetch = 0 : i64, scratch_operands = 0 : i64, tpu.core_type = #tpu.core_type<tc>, window_params = [{transform_indices = @transform_0, window_bounds = array<i64: 1, 4, 128>}, {pipeline_mode = #tpu.pipeline_mode<synchronous>, transform_indices = @transform_1, window_bounds = array<i64: 1, 4, 128>}, {pipeline_mode = #tpu.pipeline_mode<synchronous>, transform_indices = @transform_2, window_bounds = array<i64: 1, 4, 128>}, {transform_indices = @transform_3, window_bounds = array<i64: 1, 4, 128>}]} {
    %c0 = arith.constant 0 : index
    %c0_0 = arith.constant 0 : index
    %c0_1 = arith.constant 0 : index
    %0 = vector.load %arg2[%c0, %c0_0, %c0_1] : memref<1x4x128xf32, #tpu.memory_space<vmem>>, vector<1x4x128xf32>
    %cst = arith.constant dense<0.000000e+00> : vector<1x128xf32>
    %1 = vector.multi_reduction <add>, %0, %cst [1] : vector<1x4x128xf32> to vector<1x128xf32>
    %2 = vector.shape_cast %1 : vector<1x128xf32> to vector<1x1x128xf32>
    %3 = arith.mulf %0, %0 : vector<1x4x128xf32>
    %cst_2 = arith.constant dense<0.000000e+00> : vector<1x128xf32>
    %4 = vector.multi_reduction <add>, %3, %cst_2 [1] : vector<1x4x128xf32> to vector<1x128xf32>
    %5 = vector.shape_cast %4 : vector<1x128xf32> to vector<1x1x128xf32>
    %6 = tpu.iota {dimensions = array<i32: 2>} : vector<1x1x128xi32>
    %c1_i32 = arith.constant 1 : i32
    %7 = vector.broadcast %c1_i32 : i32 to vector<1x1x128xi32>
    %8 = arith.xori %6, %7 : vector<1x1x128xi32>
    %c1_i32_3 = arith.constant 1 : i32
    %9 = tpu.dynamic_rotate %6 by %c1_i32_3 dim 2 : vector<1x1x128xi32>, i32 -> vector<1x1x128xi32>
    %10 = arith.cmpi eq, %9, %8 : vector<1x1x128xi32>
    %c1_i32_4 = arith.constant 1 : i32
    %11 = tpu.dynamic_rotate %2 by %c1_i32_4 dim 2 : vector<1x1x128xf32>, i32 -> vector<1x1x128xf32>
    %c127_i32 = arith.constant 127 : i32
    %12 = tpu.dynamic_rotate %2 by %c127_i32 dim 2 : vector<1x1x128xf32>, i32 -> vector<1x1x128xf32>
    %13 = arith.select %10, %11, %12 : vector<1x1x128xi1>, vector<1x1x128xf32>
    %14 = arith.addf %2, %13 : vector<1x1x128xf32>
    %c1_i32_5 = arith.constant 1 : i32
    %15 = tpu.dynamic_rotate %5 by %c1_i32_5 dim 2 : vector<1x1x128xf32>, i32 -> vector<1x1x128xf32>
    %c127_i32_6 = arith.constant 127 : i32
    %16 = tpu.dynamic_rotate %5 by %c127_i32_6 dim 2 : vector<1x1x128xf32>, i32 -> vector<1x1x128xf32>
    %17 = arith.select %10, %15, %16 : vector<1x1x128xi1>, vector<1x1x128xf32>
    %18 = arith.addf %5, %17 : vector<1x1x128xf32>
    %c2_i32 = arith.constant 2 : i32
    %19 = vector.broadcast %c2_i32 : i32 to vector<1x1x128xi32>
    %20 = arith.xori %6, %19 : vector<1x1x128xi32>
    %c2_i32_7 = arith.constant 2 : i32
    %21 = tpu.dynamic_rotate %6 by %c2_i32_7 dim 2 : vector<1x1x128xi32>, i32 -> vector<1x1x128xi32>
    %22 = arith.cmpi eq, %21, %20 : vector<1x1x128xi32>
    %c2_i32_8 = arith.constant 2 : i32
    %23 = tpu.dynamic_rotate %14 by %c2_i32_8 dim 2 : vector<1x1x128xf32>, i32 -> vector<1x1x128xf32>
    %c126_i32 = arith.constant 126 : i32
    %24 = tpu.dynamic_rotate %14 by %c126_i32 dim 2 : vector<1x1x128xf32>, i32 -> vector<1x1x128xf32>
    %25 = arith.select %22, %23, %24 : vector<1x1x128xi1>, vector<1x1x128xf32>
    %26 = arith.addf %14, %25 : vector<1x1x128xf32>
    %c2_i32_9 = arith.constant 2 : i32
    %27 = tpu.dynamic_rotate %18 by %c2_i32_9 dim 2 : vector<1x1x128xf32>, i32 -> vector<1x1x128xf32>
    %c126_i32_10 = arith.constant 126 : i32
    %28 = tpu.dynamic_rotate %18 by %c126_i32_10 dim 2 : vector<1x1x128xf32>, i32 -> vector<1x1x128xf32>
    %29 = arith.select %22, %27, %28 : vector<1x1x128xi1>, vector<1x1x128xf32>
    %30 = arith.addf %18, %29 : vector<1x1x128xf32>
    %c4_i32 = arith.constant 4 : i32
    %31 = vector.broadcast %c4_i32 : i32 to vector<1x1x128xi32>
    %32 = arith.xori %6, %31 : vector<1x1x128xi32>
    %c4_i32_11 = arith.constant 4 : i32
    %33 = tpu.dynamic_rotate %6 by %c4_i32_11 dim 2 : vector<1x1x128xi32>, i32 -> vector<1x1x128xi32>
    %34 = arith.cmpi eq, %33, %32 : vector<1x1x128xi32>
    %c4_i32_12 = arith.constant 4 : i32
    %35 = tpu.dynamic_rotate %26 by %c4_i32_12 dim 2 : vector<1x1x128xf32>, i32 -> vector<1x1x128xf32>
    %c124_i32 = arith.constant 124 : i32
    %36 = tpu.dynamic_rotate %26 by %c124_i32 dim 2 : vector<1x1x128xf32>, i32 -> vector<1x1x128xf32>
    %37 = arith.select %34, %35, %36 : vector<1x1x128xi1>, vector<1x1x128xf32>
    %38 = arith.addf %26, %37 : vector<1x1x128xf32>
    %c4_i32_13 = arith.constant 4 : i32
    %39 = tpu.dynamic_rotate %30 by %c4_i32_13 dim 2 : vector<1x1x128xf32>, i32 -> vector<1x1x128xf32>
    %c124_i32_14 = arith.constant 124 : i32
    %40 = tpu.dynamic_rotate %30 by %c124_i32_14 dim 2 : vector<1x1x128xf32>, i32 -> vector<1x1x128xf32>
    %41 = arith.select %34, %39, %40 : vector<1x1x128xi1>, vector<1x1x128xf32>
    %42 = arith.addf %30, %41 : vector<1x1x128xf32>
    %c8_i32 = arith.constant 8 : i32
    %43 = vector.broadcast %c8_i32 : i32 to vector<1x1x128xi32>
    %44 = arith.xori %6, %43 : vector<1x1x128xi32>
    %c8_i32_15 = arith.constant 8 : i32
    %45 = tpu.dynamic_rotate %6 by %c8_i32_15 dim 2 : vector<1x1x128xi32>, i32 -> vector<1x1x128xi32>
    %46 = arith.cmpi eq, %45, %44 : vector<1x1x128xi32>
    %c8_i32_16 = arith.constant 8 : i32
    %47 = tpu.dynamic_rotate %38 by %c8_i32_16 dim 2 : vector<1x1x128xf32>, i32 -> vector<1x1x128xf32>
    %c120_i32 = arith.constant 120 : i32
    %48 = tpu.dynamic_rotate %38 by %c120_i32 dim 2 : vector<1x1x128xf32>, i32 -> vector<1x1x128xf32>
    %49 = arith.select %46, %47, %48 : vector<1x1x128xi1>, vector<1x1x128xf32>
    %50 = arith.addf %38, %49 : vector<1x1x128xf32>
    %c8_i32_17 = arith.constant 8 : i32
    %51 = tpu.dynamic_rotate %42 by %c8_i32_17 dim 2 : vector<1x1x128xf32>, i32 -> vector<1x1x128xf32>
    %c120_i32_18 = arith.constant 120 : i32
    %52 = tpu.dynamic_rotate %42 by %c120_i32_18 dim 2 : vector<1x1x128xf32>, i32 -> vector<1x1x128xf32>
    %53 = arith.select %46, %51, %52 : vector<1x1x128xi1>, vector<1x1x128xf32>
    %54 = arith.addf %42, %53 : vector<1x1x128xf32>
    %cst_19 = arith.constant 1.562500e-02 : f32
    %55 = vector.broadcast %cst_19 : f32 to vector<1x1x128xf32>
    %56 = arith.mulf %50, %55 : vector<1x1x128xf32>
    %cst_20 = arith.constant 1.562500e-02 : f32
    %57 = vector.broadcast %cst_20 : f32 to vector<1x1x128xf32>
    %58 = arith.mulf %54, %57 : vector<1x1x128xf32>
    %59 = arith.mulf %56, %56 : vector<1x1x128xf32>
    %60 = arith.subf %58, %59 : vector<1x1x128xf32>
    %cst_21 = arith.constant 0.000000e+00 : f32
    %61 = vector.broadcast %cst_21 : f32 to vector<1x1x128xf32>
    %62 = arith.maximumf %60, %61 : vector<1x1x128xf32>
    %cst_22 = arith.constant 9.99999974E-6 : f32
    %63 = vector.broadcast %cst_22 : f32 to vector<1x1x128xf32>
    %64 = arith.addf %62, %63 : vector<1x1x128xf32>
    %65 = math.rsqrt %64 : vector<1x1x128xf32>
    %66 = vector.broadcast %56 : vector<1x1x128xf32> to vector<1x4x128xf32>
    %67 = arith.subf %0, %66 : vector<1x4x128xf32>
    %68 = vector.broadcast %65 : vector<1x1x128xf32> to vector<1x4x128xf32>
    %69 = arith.mulf %67, %68 : vector<1x4x128xf32>
    %c0_23 = arith.constant 0 : index
    %c0_24 = arith.constant 0 : index
    %c0_25 = arith.constant 0 : index
    %70 = vector.load %arg3[%c0_23, %c0_24, %c0_25] : memref<1x4x128xf32, #tpu.memory_space<vmem>>, vector<1x4x128xf32>
    %71 = arith.mulf %69, %70 : vector<1x4x128xf32>
    %c0_26 = arith.constant 0 : index
    %c0_27 = arith.constant 0 : index
    %c0_28 = arith.constant 0 : index
    %72 = vector.load %arg4[%c0_26, %c0_27, %c0_28] : memref<1x4x128xf32, #tpu.memory_space<vmem>>, vector<1x4x128xf32>
    %73 = arith.addf %71, %72 : vector<1x4x128xf32>
    %c0_29 = arith.constant 0 : index
    %c0_30 = arith.constant 0 : index
    %c0_31 = arith.constant 0 : index
    %74 = vector.load %arg5[%c0_29, %c0_30, %c0_31] : memref<1x4x128xf32, #tpu.memory_space<vmem>>, vector<1x4x128xf32>
    tpu.vector_store %arg5[%c0_29, %c0_30, %c0_31], %73 {strides = array<i32>} : memref<1x4x128xf32, #tpu.memory_space<vmem>>, vector<1x4x128xf32>,
    return
  }
  func.func @transform_0(%arg0: i32, %arg1: i32) -> (i32, i32, i32) {
    %c0_i32 = arith.constant 0 : i32
    %c0_i32_0 = arith.constant 0 : i32
    return %arg0, %c0_i32, %arg1 : i32, i32, i32
  }
  func.func @transform_1(%arg0: i32, %arg1: i32) -> (i32, i32, i32) {
    %c0_i32 = arith.constant 0 : i32
    %c0_i32_0 = arith.constant 0 : i32
    %c0_i32_1 = arith.constant 0 : i32
    %c0_i32_2 = arith.constant 0 : i32
    return %c0_i32, %c0_i32_0, %c0_i32_1 : i32, i32, i32
  }
  func.func @transform_2(%arg0: i32, %arg1: i32) -> (i32, i32, i32) {
    %c0_i32 = arith.constant 0 : i32
    %c0_i32_0 = arith.constant 0 : i32
    %c0_i32_1 = arith.constant 0 : i32
    %c0_i32_2 = arith.constant 0 : i32
    return %c0_i32, %c0_i32_0, %c0_i32_1 : i32, i32, i32
  }
  func.func @transform_3(%arg0: i32, %arg1: i32) -> (i32, i32, i32) {
    %c0_i32 = arith.constant 0 : i32
    %c0_i32_0 = arith.constant 0 : i32
    return %arg0, %c0_i32, %arg1 : i32, i32, i32
  }
}

</mosaic_0001>

<llo_original>
// kernel: tpu_custom_call.1
$region0: #{tpu_custom_call.1}
  #allocation0 [shape = 'u32[]', space=smem, size = 0x4, offset = 0x4, fixed_abs, tag = 'smem constant byte address 0x4 - core index']
  #allocation1 [shape = 'u32[72,128]{1,0:T(1,128)}', space=vmem, size = 0x9000, scoped, tag = 'internal scratch']
  %s0 = inlined_call_operand.hbm [shape: f32[2,4,256], index: 0, kind: input, shape index: {}]
  %s1 = inlined_call_operand.hbm [shape: f32[1,4,128], index: 1, kind: input, shape index: {}]
  %s2 = inlined_call_operand.hbm [shape: f32[1,4,128], index: 2, kind: input, shape index: {}]
  %s3 = inlined_call_operand.hbm [shape: f32[2,4,256], index: 3, kind: output, shape index: {}]
  %s4 = sld [smem:[#allocation0]]
  $region57: #{tpu_custom_call.1} parent=0
    _
  %s6 = ssub.s32 1, %s4
  %s7 = scalar_select 0, %s6, %s4
  $region1: #{tpu_custom_call.1} parent=0
    #allocation2 [shape = 'u8[4096]{0}', space=vmem, size = 0x1000, scoped, tag = 'input window, operand 0']
    #allocation3 [shape = 's32[2]{0}', space=sflag, size = 0x8, scoped, tag = 'scoped memory for tpu_custom_call.1']
    #allocation4 [shape = 's32[2]{0}', space=sflag, size = 0x8, scoped, tag = 'scoped memory for tpu_custom_call.1']
    #allocation5 [shape = 'u8[2048]{0}', space=vmem, size = 0x800, scoped, tag = 'input window, operand 1, single buffered']
    #allocation6 [shape = 's32[1]{0}', space=sflag, size = 0x4, scoped, tag = 'scoped memory for tpu_custom_call.1']
    #allocation7 [shape = 'u8[2048]{0}', space=vmem, size = 0x800, scoped, tag = 'input window, operand 2, single buffered']
    #allocation8 [shape = 'u8[4096]{0}', space=vmem, size = 0x1000, scoped, tag = 'output window, operand 0']
    %8 = vsyncpa [#allocation3], 0
    %s9 = scalar_lea.sflag [#allocation3], 1
    %10 = vsyncpa %s9, 0
    %11 = vsyncpa [#allocation6], 0
    %12 = vsyncpa [#allocation4], 0
    %s13 = scalar_lea.sflag [#allocation4], 1
    %14 = vsyncpa %s13, 0
    loop: start=0, step=1, limit=6
    $region2: #{tpu_custom_call.1} parent=1 // loop_pre_header
      _
    $region3: #{tpu_custom_call.1} parent=1 // loop_header
      %s16 = sphi 0, %s20
      %p17 = scmp.ge.s32.totalorder %s16, 6
      %s23 = sphi 0, %s35
      %s24 = sphi 0, %s31
      %s25 = sphi 0, %s23
      %s26 = sphi 0, %s24
      %s27 = sphi 0, %s25
      %s28 = sphi 0, %s26
      %s40 = sphi 0, %s42
      %s43 = sphi 0, %s40
      %s44 = sphi 0, %s43
      %s60 = sphi 0, %s44
      %s64 = sphi 0, %s64
      %s66 = sphi 0, %s64
      %s67 = sphi 0, %s66
      %s81 = sphi 0, %s67
      %s85 = sphi 0, %s85
      %s87 = sphi 0, %s85
      %s88 = sphi 0, %s87
      %s102 = sphi 0, %s88
      %s110 = sphi 0, %s112
      %s113 = sphi 0, %s110
      %s114 = sphi 0, %s113
      %s130 = sphi 0, %s114
    $region4: #{tpu_custom_call.1} parent=1 // loop_header_branch
      %19 = sbr.rel (%p17) target = $region8
    $region5: #{tpu_custom_call.1} parent=1 // loop_body
      %s21 = ssub.s32 %s16, 1
      %s22 = ssub.s32 %s16, 2
      %s29 = sadd.s32 1, %s24
      %p30 = scmp.ge.s32.totalorder %s29, 2
      %s31 = scalar_select %p30, 0, %s29
      %s32 = sadd.s32 1, %s23
      %s33 = scalar_select %p30, %s32, %s23
      %p34 = scmp.ge.s32.totalorder %s33, 2
      %s35 = scalar_select %p34, 0, %s33
      %s36 = ssub.s32 %s23, %s35
      %s37 = ssub.s32 %s24, %s31
      %s38 = sor.u32 %s36, %s37
      %p39 = scmp.eq.s32.totalorder %s38, 0
      %s41 = sadd.s32 %s40, 1
      %s42 = scalar_select %p39, %s40, %s41
      %p45 = pneg %p39
      %p46 = scmp.eq.s32.totalorder %s16, 3
      %p47 = por %p45, %p46
      %p48 = scmp.ne.s32.totalorder %s40, %s43
      %p49 = scmp.eq.s32.totalorder %s16, 0
      %p50 = por %p48, %p49
      %p51 = scmp.ne.s32.totalorder %s40, %s43
      %p52 = scmp.eq.s32.totalorder %s21, 3
      %p53 = por %p51, %p52
      %p54 = scmp.ne.s32.totalorder %s43, %s44
      %p55 = scmp.eq.s32.totalorder %s21, 0
      %p56 = por %p54, %p55
      %p57 = scmp.ne.s32.totalorder %s43, %s44
      %p58 = scmp.eq.s32.totalorder %s22, 3
      %p59 = por %p57, %p58
      %p61 = scmp.ne.s32.totalorder %s44, %s60
      %p62 = scmp.eq.s32.totalorder %s22, 0
      %p63 = por %p61, %p62
      %s65 = sadd.s32 %s64, 1
      %p68 = scmp.eq.s32.totalorder %s16, 3
      %p69 = scmp.ne.s32.totalorder %s64, %s66
      %p70 = scmp.eq.s32.totalorder %s16, 0
      %p71 = por %p69, %p70
      %p72 = scmp.ne.s32.totalorder %s64, %s66
      %p73 = scmp.eq.s32.totalorder %s21, 3
      %p74 = por %p72, %p73
      %p75 = scmp.ne.s32.totalorder %s66, %s67
      %p76 = scmp.eq.s32.totalorder %s21, 0
      %p77 = por %p75, %p76
      %p78 = scmp.ne.s32.totalorder %s66, %s67
      %p79 = scmp.eq.s32.totalorder %s22, 3
      %p80 = por %p78, %p79
      %p82 = scmp.ne.s32.totalorder %s67, %s81
      %p83 = scmp.eq.s32.totalorder %s22, 0
      %p84 = por %p82, %p83
      %s86 = sadd.s32 %s85, 1
      %p89 = scmp.eq.s32.totalorder %s16, 3
      %p90 = scmp.ne.s32.totalorder %s85, %s87
      %p91 = scmp.eq.s32.totalorder %s16, 0
      %p92 = por %p90, %p91
      %p93 = scmp.ne.s32.totalorder %s85, %s87
      %p94 = scmp.eq.s32.totalorder %s21, 3
      %p95 = por %p93, %p94
      %p96 = scmp.ne.s32.totalorder %s87, %s88
      %p97 = scmp.eq.s32.totalorder %s21, 0
      %p98 = por %p96, %p97
      %p99 = scmp.ne.s32.totalorder %s87, %s88
      %p100 = scmp.eq.s32.totalorder %s22, 3
      %p101 = por %p99, %p100
      %p103 = scmp.ne.s32.totalorder %s88, %s102
      %p104 = scmp.eq.s32.totalorder %s22, 0
      %p105 = por %p103, %p104
      %s106 = ssub.s32 %s23, %s35
      %s107 = ssub.s32 %s24, %s31
      %s108 = sor.u32 %s106, %s107
      %p109 = scmp.eq.s32.totalorder %s108, 0
      %s111 = sadd.s32 %s110, 1
      %s112 = scalar_select %p109, %s110, %s111
      %p115 = pneg %p109
      %p116 = scmp.eq.s32.totalorder %s16, 3
      %p117 = por %p115, %p116
      %p118 = scmp.ne.s32.totalorder %s110, %s113
      %p119 = scmp.eq.s32.totalorder %s16, 0
      %p120 = por %p118, %p119
      %p121 = scmp.ne.s32.totalorder %s110, %s113
      %p122 = scmp.eq.s32.totalorder %s21, 3
      %p123 = por %p121, %p122
      %p124 = scmp.ne.s32.totalorder %s113, %s114
      %p125 = scmp.eq.s32.totalorder %s21, 0
      %p126 = por %p124, %p125
      %p127 = scmp.ne.s32.totalorder %s113, %s114
      %p128 = scmp.eq.s32.totalorder %s22, 3
      %p129 = por %p127, %p128
      %p131 = scmp.ne.s32.totalorder %s114, %s130
      %p132 = scmp.eq.s32.totalorder %s22, 0
      %p133 = por %p131, %p132
      %p134 = scmp.le.s32.totalorder 1, %s16
      %p135 = scmp.lt.s32.totalorder %s16, 5
      %p136 = pnand %p134, %p135
      %p137 = pneg %p136
      // Predicated region
      $region9: #{tpu_custom_call.1} parent=5 // pred_check
        _
      $region10: #{tpu_custom_call.1} parent=5 // pred_check_branch
        %139 = sbr.rel (%p136) target = $region12
      $region11: #{tpu_custom_call.1} parent=5 // pred_region
        %s140 = ssub.s32 %s16, 1
        // Predicated region
        $region13: #{tpu_custom_call.1} parent=11 // pred_check
          %p141 = pneg %p77
        $region14: #{tpu_custom_call.1} parent=11 // pred_check_branch
          %143 = sbr.rel (%p141) target = $region16
        $region15: #{tpu_custom_call.1} parent=11 // pred_region
          %145 = vsyncadd [#allocation6], 0
          %s147 = sshll.u32 %s1, 4
          %s148 = int_to_ptr.hbm [resolvable:$true] %s147
          %s149 = sshll.u32 [#allocation5], 4
          %s150 = int_to_ptr.vmem [resolvable:$true] %s149
          %152 = dma.hbm_to_vmem [thread:$0]  %s148, 64, %s150, [#allocation6]
        $region16: #{tpu_custom_call.1} parent=11 // pred_fallthru
          _
        // Predicated region
        $region17: #{tpu_custom_call.1} parent=11 // pred_check
          %p153 = pneg %p98
        $region18: #{tpu_custom_call.1} parent=11 // pred_check_branch
          %155 = sbr.rel (%p153) target = $region20
        $region19: #{tpu_custom_call.1} parent=11 // pred_region
          %157 = vsyncadd [#allocation6], 0
          %s159 = sshll.u32 %s2, 4
          %s160 = int_to_ptr.hbm [resolvable:$true] %s159
          %s161 = sshll.u32 [#allocation7], 4
          %s162 = int_to_ptr.vmem [resolvable:$true] %s161
          %164 = dma.hbm_to_vmem [thread:$0]  %s160, 64, %s162, [#allocation6]
        $region20: #{tpu_custom_call.1} parent=11 // pred_fallthru
          _
      $region12: #{tpu_custom_call.1} parent=5 // pred_fallthru
        _
      %p165 = scmp.lt.s32.totalorder %s16, 4
      // Predicated region
      $region21: #{tpu_custom_call.1} parent=5 // pred_check
        %p166 = pneg %p165
      $region22: #{tpu_custom_call.1} parent=5 // pred_check_branch
        %168 = sbr.rel (%p166) target = $region24
      $region23: #{tpu_custom_call.1} parent=5 // pred_region
        // Predicated region
        $region25: #{tpu_custom_call.1} parent=23 // pred_check
          %p169 = pneg %p50
        $region26: #{tpu_custom_call.1} parent=23 // pred_check_branch
          %171 = sbr.rel (%p169) target = $region28
        $region27: #{tpu_custom_call.1} parent=23 // pred_region
          %s172 = sand.u32 %s40, 1
          %s173 = scalar_lea.sflag [#allocation3], %s172
          %s174 = sand.u32 %s40, 1
          %s175 = smul.addr %s174, 4
          %s176 = scalar_lea.vmem [#allocation2], %s175
          %178 = vsyncadd %s173, 0
          %s179 = smul.addr %s23, 2
          %s180 = sadd.s32 %s24, %s179
          %s181 = smul.addr %s180, 4
          %s182 = scalar_lea.hbm %s0, %s181
          %s184 = sshll.u32 %s182, 4
          %s185 = int_to_ptr.hbm [resolvable:$true] %s184
          %s186 = sshll.u32 %s176, 4
          %s187 = int_to_ptr.vmem [resolvable:$true] %s186
          %189 = dma.hbm_to_vmem [thread:$0]  %s185, 64, %s187, %s173
        $region28: #{tpu_custom_call.1} parent=23 // pred_fallthru
          _
      $region24: #{tpu_custom_call.1} parent=5 // pred_fallthru
        _
      %p190 = scmp.le.s32.totalorder 1, %s16
      %p191 = scmp.lt.s32.totalorder %s16, 5
      %p192 = pnand %p190, %p191
      %p193 = pneg %p192
      // Predicated region
      $region29: #{tpu_custom_call.1} parent=5 // pred_check
        _
      $region30: #{tpu_custom_call.1} parent=5 // pred_check_branch
        %195 = sbr.rel (%p192) target = $region32
      $region31: #{tpu_custom_call.1} parent=5 // pred_region
        %s196 = ssub.s32 %s16, 1
        %s197 = sand.u32 %s43, 1
        %s198 = scalar_lea.sflag [#allocation3], %s197
        %s199 = sand.u32 %s43, 1
        %s200 = smul.addr %s199, 4
        %s201 = scalar_lea.vmem [#allocation2], %s200
        // Predicated region
        $region33: #{tpu_custom_call.1} parent=31 // pred_check
          %p202 = pneg %p56
        $region34: #{tpu_custom_call.1} parent=31 // pred_check_branch
          %204 = sbr.rel (%p202) target = $region36
        $region35: #{tpu_custom_call.1} parent=31 // pred_region
          %206 = dma.done %s198, 64
        $region36: #{tpu_custom_call.1} parent=31 // pred_fallthru
          _
        // Predicated region
        $region37: #{tpu_custom_call.1} parent=31 // pred_check
          %p207 = pneg %p77
        $region38: #{tpu_custom_call.1} parent=31 // pred_check_branch
          %209 = sbr.rel (%p207) target = $region40
        $region39: #{tpu_custom_call.1} parent=31 // pred_region
          %211 = dma.done [#allocation6], 64
        $region40: #{tpu_custom_call.1} parent=31 // pred_fallthru
          _
        // Predicated region
        $region41: #{tpu_custom_call.1} parent=31 // pred_check
          %p212 = pneg %p98
        $region42: #{tpu_custom_call.1} parent=31 // pred_check_branch
          %214 = sbr.rel (%p212) target = $region44
        $region43: #{tpu_custom_call.1} parent=31 // pred_region
          %216 = dma.done [#allocation6], 64
        $region44: #{tpu_custom_call.1} parent=31 // pred_fallthru
          _
        %s217 = sand.u32 %s43, 1
        %s218 = scalar_lea.sflag [#allocation3], %s217
        %s219 = sand.u32 %s43, 1
        %s220 = smul.addr %s219, 4
        %s221 = scalar_lea.vmem [#allocation2], %s220
        %p222 = pneg %p56
        %p223 = pneg %p53
        %p224 = pneg %p77
        %p225 = pneg %p74
        %p226 = pneg %p98
        %p227 = pneg %p95
        %p228 = pneg %p126
        %p229 = pneg %p123
        %s230 = sand.u32 %s113, 1
        %s231 = scalar_lea.sflag [#allocation4], %s230
        %s232 = sand.u32 %s113, 1
        %s233 = smul.addr %s232, 4
        %s234 = scalar_lea.vmem [#allocation8], %s233
        %v235 = vld [vmem:[%s201] sm:$0xf]
        %vm236 = vcmask 1043456
        %v237 = vsel %vm236, %v235, 0.0
        %v238 = vrot.slane %v237, 4
        %v239 = vadd.f32 %v237, %v238
        %v240 = vrot.slane %v239, 2
        %v241 = vadd.f32 %v239, %v240
        %v242 = vrot.slane %v241, 1
        %v243 = vadd.f32 %v241, %v242
        %v244 = vmul.f32 %v235, %v235
        %v245 = vsel %vm236, %v244, 0.0
        %v246 = vrot.slane %v245, 4
        %v247 = vadd.f32 %v245, %v246
        %v248 = vrot.slane %v247, 2
        %v249 = vadd.f32 %v247, %v248
        %v250 = vrot.slane %v249, 1
        %v251 = vadd.f32 %v249, %v250
        %v252 = vlaneseq
        %v253 = vand.u32 %v252, 127
        %v254 = vxor.u32 %v253, 1
        %255 = vrot.lane.b32.xlu0 %v253, 1
        %v256 = vpop.permute.xlu0 %255
        %vm257 = vcmp.eq.s32.totalorder %v256, %v254
        %258 = vrot.lane.b32.xlu0 %v243, 1
        %v259 = vpop.permute.xlu0 %258
        %260 = vrot.lane.b32.xlu0 %v243, 127
        %v261 = vpop.permute.xlu0 %260
        %v262 = vsel %vm257, %v259, %v261
        %v263 = vadd.f32 %v243, %v262
        %264 = vrot.lane.b32.xlu0 %v251, 1
        %v265 = vpop.permute.xlu0 %264
        %266 = vrot.lane.b32.xlu0 %v251, 127
        %v267 = vpop.permute.xlu0 %266
        %v268 = vsel %vm257, %v265, %v267
        %v269 = vadd.f32 %v251, %v268
        %v270 = vxor.u32 %v253, 2
        %271 = vrot.lane.b32.xlu0 %v253, 2
        %v272 = vpop.permute.xlu0 %271
        %vm273 = vcmp.eq.s32.totalorder %v272, %v270
        %274 = vrot.lane.b32.xlu0 %v263, 2
        %v275 = vpop.permute.xlu0 %274
        %276 = vrot.lane.b32.xlu0 %v263, 126
        %v277 = vpop.permute.xlu0 %276
        %v278 = vsel %vm273, %v275, %v277
        %v279 = vadd.f32 %v263, %v278
        %280 = vrot.lane.b32.xlu0 %v269, 2
        %v281 = vpop.permute.xlu0 %280
        %282 = vrot.lane.b32.xlu0 %v269, 126
        %v283 = vpop.permute.xlu0 %282
        %v284 = vsel %vm273, %v281, %v283
        %v285 = vadd.f32 %v269, %v284
        %v286 = vxor.u32 %v253, 4
        %287 = vrot.lane.b32.xlu0 %v253, 4
        %v288 = vpop.permute.xlu0 %287
        %vm289 = vcmp.eq.s32.totalorder %v288, %v286
        %290 = vrot.lane.b32.xlu0 %v279, 4
        %v291 = vpop.permute.xlu0 %290
        %292 = vrot.lane.b32.xlu0 %v279, 124
        %v293 = vpop.permute.xlu0 %292
        %v294 = vsel %vm289, %v291, %v293
        %v295 = vadd.f32 %v279, %v294
        %296 = vrot.lane.b32.xlu0 %v285, 4
        %v297 = vpop.permute.xlu0 %296
        %298 = vrot.lane.b32.xlu0 %v285, 124
        %v299 = vpop.permute.xlu0 %298
        %v300 = vsel %vm289, %v297, %v299
        %v301 = vadd.f32 %v285, %v300
        %v302 = vxor.u32 %v253, 8
        %303 = vrot.lane.b32.xlu0 %v253, 8
        %v304 = vpop.permute.xlu0 %303
        %vm305 = vcmp.eq.s32.totalorder %v304, %v302
        %306 = vrot.lane.b32.xlu0 %v295, 8
        %v307 = vpop.permute.xlu0 %306
        %308 = vrot.lane.b32.xlu0 %v295, 120
        %v309 = vpop.permute.xlu0 %308
        %v310 = vsel %vm305, %v307, %v309
        %v311 = vadd.f32 %v295, %v310
        %312 = vrot.lane.b32.xlu0 %v301, 8
        %v313 = vpop.permute.xlu0 %312
        %314 = vrot.lane.b32.xlu0 %v301, 120
        %v315 = vpop.permute.xlu0 %314
        %v316 = vsel %vm305, %v313, %v315
        %v317 = vadd.f32 %v301, %v316
        %v318 = vmul.f32 %v311, 0.015625
        %v319 = vmul.f32 %v317, 0.015625
        %v320 = vmul.f32 %v318, %v318
        %v321 = vsub.f32 %v319, %v320
        %v322 = vmax.f32 %v321, 0.0
        %v323 = vadd.f32 %v322, 1e-05
        %v324 = vrsqrt.pop %v323
        %v325 = vmul.f32 %v324, %v323
        %v326 = vmul.f32 %v325, %v324
        %v327 = vmul.f32 0.5, %v326
        %v328 = vsub.f32 1.5, %v327
        %v329 = vmul.f32 %v324, %v328
        %vm330 = vweird.f32 %v323
        %vm331 = vweird.f32 %v324
        %vm332 = vmor %vm330, %vm331
        %v333 = vsel %vm332, %v324, %v329
        %v334 = vperm.slane %v318, 0
        %v335 = vsub.f32 %v235, %v334
        %v336 = vperm.slane %v333, 0
        %v337 = vmul.f32 %v335, %v336
        %v338 = vld [vmem:[#allocation5] sm:$0xf]
        %v339 = vmul.f32 %v337, %v338
        %v340 = vld [vmem:[#allocation7] sm:$0xf]
        %v341 = vadd.f32 %v339, %v340
        %342 = vst [vmem:[%s234] sm:$0xf] %v341
        %s343 = sand.u32 %s113, 1
        %s344 = scalar_lea.sflag [#allocation4], %s343
        %s345 = sand.u32 %s113, 1
        %s346 = smul.addr %s345, 4
        %s347 = scalar_lea.vmem [#allocation8], %s346
        // Predicated region
        $region45: #{tpu_custom_call.1} parent=31 // pred_check
          %p348 = pneg %p123
        $region46: #{tpu_custom_call.1} parent=31 // pred_check_branch
          %350 = sbr.rel (%p348) target = $region48
        $region47: #{tpu_custom_call.1} parent=31 // pred_region
          %352 = vsyncadd %s344, 0
          %s353 = smul.addr %s25, 2
          %s354 = sadd.s32 %s26, %s353
          %s355 = smul.addr %s354, 4
          %s356 = scalar_lea.hbm %s3, %s355
          %s358 = sshll.u32 %s347, 4
          %s359 = int_to_ptr.vmem [resolvable:$true] %s358
          %s360 = sshll.u32 %s356, 4
          %s361 = int_to_ptr.hbm [resolvable:$true] %s360
          %363 = dma.vmem_to_hbm [thread:$0]  %s359, 64, %s361, %s344
        $region48: #{tpu_custom_call.1} parent=31 // pred_fallthru
          _
      $region32: #{tpu_custom_call.1} parent=5 // pred_fallthru
        _
      %p364 = scmp.le.s32.totalorder 2, %s16
      // Predicated region
      $region49: #{tpu_custom_call.1} parent=5 // pred_check
        %p365 = pneg %p364
      $region50: #{tpu_custom_call.1} parent=5 // pred_check_branch
        %367 = sbr.rel (%p365) target = $region52
      $region51: #{tpu_custom_call.1} parent=5 // pred_region
        %s368 = ssub.s32 %s16, 2
        // Predicated region
        $region53: #{tpu_custom_call.1} parent=51 // pred_check
          %p369 = pneg %p129
        $region54: #{tpu_custom_call.1} parent=51 // pred_check_branch
          %371 = sbr.rel (%p369) target = $region56
        $region55: #{tpu_custom_call.1} parent=51 // pred_region
          %s372 = sand.u32 %s114, 1
          %s373 = scalar_lea.sflag [#allocation4], %s372
          %s374 = sand.u32 %s114, 1
          %s375 = smul.addr %s374, 4
          %s376 = scalar_lea.vmem [#allocation8], %s375
          %378 = dma.done %s373, 64
        $region56: #{tpu_custom_call.1} parent=51 // pred_fallthru
          _
      $region52: #{tpu_custom_call.1} parent=5 // pred_fallthru
        _
    $region6: #{tpu_custom_call.1} parent=1 // loop_footer
      %s20 = sadd.s32 1, %s16
    $region7: #{tpu_custom_call.1} parent=1 // loop_footer_branch
      %15 = sbr.rel target = $region3
    $region8: #{tpu_custom_call.1} parent=1 // loop_exit
      _
    %379 = vsyncpa [#allocation3], 1
    %s380 = scalar_lea.sflag [#allocation3], 1
    %381 = vsyncpa %s380, 1
    %382 = vsyncpa [#allocation6], 1
    %383 = vsyncpa [#allocation4], 1
    %s384 = scalar_lea.sflag [#allocation4], 1
    %385 = vsyncpa %s384, 1

</llo_original>
